<compile_context>
chip_gen: v7x
topology: tpu7x:2x2x1
jax: 0.10.0
libtpu: 0.0.40
codegen_flags: <defaults>
</compile_context>

<pallas_src>
import functools

import jax
import jax.numpy as jnp
import numpy as np
from jax.experimental import pallas as pl
from jax.experimental.pallas import tpu as pltpu


# ---------------------------------------------------------------------------
# Pass 1: depthwise dilated conv + per-tile BatchNorm partial statistics
# ---------------------------------------------------------------------------
def _dw_stats_kernel(x_ref, wdw_ref, bdw_ref, dw_ref, stats_ref, *,
                     kernel_size, dilation, stride, t_tile, t_valid,
                     n_t_tiles):
    # x_ref:     (1, C, T_in_need)  full time axis for this batch sample
    # wdw_ref:   (C, K)             depthwise weights
    # bdw_ref:   (C, 1)             depthwise bias
    # dw_ref:    (1, C, t_tile)     depthwise conv output tile (f32)
    # stats_ref: (1, 1, C, 2)       per-(sample, tile) [sum, sumsq] per channel
    if n_t_tiles == 1:
        start = 0                                   # fully static slicing
    else:
        start = pl.multiple_of(pl.program_id(1) * (t_tile * stride),
                               t_tile * stride)

    w = wdw_ref[...].astype(jnp.float32)            # (C, K)
    b = bdw_ref[...].astype(jnp.float32)            # (C, 1)
    span = (t_tile - 1) * stride + 1

    def tap(k):
        off = start + k * dilation
        if stride == 1:
            xs = x_ref[0, :, pl.ds(off, t_tile)]    # contiguous fast path
        else:
            # TODO(synk): stride > 1 strided tap is done on a loaded window;
            # a ref-level strided DMA would avoid the in-VMEM shuffle.
            xs = x_ref[0, :, pl.ds(off, span)][:, ::stride]
        return xs.astype(jnp.float32) * w[:, k:k + 1]

    # Two independent accumulator chains -> more VALU ILP than a serial chain.
    acc0 = tap(0) + b
    acc1 = tap(1) if kernel_size > 1 else jnp.zeros_like(acc0)
    for k in range(2, kernel_size):
        if k % 2 == 0:
            acc0 = acc0 + tap(k)
        else:
            acc1 = acc1 + tap(k)
    dw = acc0 + acc1                                # (C, t_tile) f32

    dw_ref[0] = dw.astype(dw_ref.dtype)

    # Partial batch stats; mask out padded tail positions of the last tile.
    if t_tile * n_t_tiles > t_valid:
        t_global = jax.lax.broadcasted_iota(jnp.int32, (1, t_tile), 1)
        if n_t_tiles > 1:
            t_global = t_global + pl.program_id(1) * t_tile
        mask = (t_global < t_valid).astype(jnp.float32)     # (1, t_tile)
        dwm = dw * mask
    else:
        dwm = dw
    stats_ref[0, 0, :, 0:1] = jnp.sum(dwm, axis=1, keepdims=True)
    stats_ref[0, 0, :, 1:2] = jnp.sum(dwm * dw, axis=1, keepdims=True)


# ---------------------------------------------------------------------------
# Pass 2: BN-folded pointwise (1x1) conv — a single matmul per tile
# ---------------------------------------------------------------------------
def _pointwise_kernel(dw_ref, w_ref, b_ref, out_ref):
    # dw_ref: (1, C, t_tile); w_ref: (O, C); b_ref: (O, 1); out_ref: (1, O, t_tile)
    y = dw_ref[0]                                           # (C, t_tile)
    out = jnp.dot(w_ref[...], y, preferred_element_type=jnp.float32)
    out_ref[0] = (out + b_ref[...]).astype(out_ref.dtype)


# ---------------------------------------------------------------------------
# Wrapper
# ---------------------------------------------------------------------------
def ds_dilated_conv1d(x_nct, w_dw, b_dw, gamma, beta, w_pw, b_pw,
                      *, kernel_size, dilation=1, stride=1, eps=1e-5,
                      max_t_tile=512):
    """x_nct: (N, C_in, T) PyTorch layout. Returns (N, C_out, T_out)."""
    N, C, T = x_nct.shape
    O = w_pw.shape[0]
    rf = dilation * (kernel_size - 1)
    T_out = (T - rf - 1) // stride + 1
    assert T_out > 0
    assert max_t_tile % 128 == 0

    # ---- T tiling (lane-dense 512-wide tiles when T is large) -----------
    if T_out <= max_t_tile:
        t_tile, n_t = T_out, 1
    else:
        t_tile = max_t_tile
        n_t = pl.cdiv(T_out, t_tile)
    T_pad = n_t * t_tile

    # Input samples needed to produce T_pad outputs (trim / zero-pad T only).
    T_in_need = (T_pad - 1) * stride + rf + 1
    x = x_nct
    if T_in_need <= T:
        x = x[:, :, :T_in_need]
    else:
        x = jnp.pad(x, ((0, 0), (0, 0), (0, T_in_need - T)))

    wdw = w_dw.reshape(C, kernel_size).astype(jnp.float32)
    bdw = b_dw.reshape(C, 1).astype(jnp.float32)

    # ---- pass 1: depthwise conv + streaming batch stats ------------------
    kern1 = functools.partial(
        _dw_stats_kernel, kernel_size=kernel_size, dilation=dilation,
        stride=stride, t_tile=t_tile, t_valid=T_out, n_t_tiles=n_t)

    dw, stats = pl.pallas_call(
        kern1,
        out_shape=(jax.ShapeDtypeStruct((N, C, T_pad), jnp.float32),
                   jax.ShapeDtypeStruct((N, n_t, C, 2), jnp.float32)),
        grid=(N, n_t),
        in_specs=[
            pl.BlockSpec((1, C, T_in_need), lambda n, t: (n, 0, 0)),
            pl.BlockSpec((C, kernel_size), lambda n, t: (0, 0)),
            pl.BlockSpec((C, 1), lambda n, t: (0, 0)),
        ],
        out_specs=(
            pl.BlockSpec((1, C, t_tile), lambda n, t: (n, 0, t)),
            pl.BlockSpec((1, 1, C, 2), lambda n, t: (n, t, 0, 0)),
        ),
        compiler_params=pltpu.CompilerParams(
            dimension_semantics=("parallel", "parallel")),
    )(x, wdw, bdw)

    # ---- fold BatchNorm (training-mode biased batch stats) into pointwise
    cnt = jnp.float32(N * T_out)
    ch_sum = jnp.sum(stats[..., 0], axis=(0, 1))            # (C,)
    ch_ssq = jnp.sum(stats[..., 1], axis=(0, 1))            # (C,)
    mean = ch_sum / cnt
    var = jnp.maximum(ch_ssq / cnt - mean * mean, 0.0)
    scale = gamma.astype(jnp.float32) * jax.lax.rsqrt(var + eps)     # (C,)
    shift = beta.astype(jnp.float32) - mean * scale                  # (C,)
    wpw = w_pw.reshape(O, C).astype(jnp.float32)
    w_fold = wpw * scale[None, :]                                    # (O, C)
    b_fold = (b_pw.astype(jnp.float32) + wpw @ shift).reshape(O, 1)  # (O, 1)

    # ---- pass 2: pointwise matmul, output directly in (N, O, T) layout ---
    out_pad = pl.pallas_call(
        _pointwise_kernel,
        out_shape=jax.ShapeDtypeStruct((N, O, T_pad), jnp.float32),
        grid=(N, n_t),
        in_specs=[
            pl.BlockSpec((1, C, t_tile), lambda n, t: (n, 0, t)),
            pl.BlockSpec((O, C), lambda n, t: (0, 0)),
            pl.BlockSpec((O, 1), lambda n, t: (0, 0)),
        ],
        out_specs=pl.BlockSpec((1, O, t_tile), lambda n, t: (n, 0, t)),
        compiler_params=pltpu.CompilerParams(
            dimension_semantics=("parallel", "parallel")),
    )(dw, w_fold, b_fold)

    return out_pad[:, :, :T_out]


# ---------------------------------------------------------------------------
# Pure-JAX reference (same semantics as the PyTorch module's forward)
# ---------------------------------------------------------------------------
def _reference(x_nct, w_dw, b_dw, gamma, beta, w_pw, b_pw,
               *, kernel_size, dilation, stride, eps=1e-5):
    N, C, T = x_nct.shape
    O = w_pw.shape[0]
    rf = dilation * (kernel_size - 1)
    T_out = (T - rf - 1) // stride + 1
    x = jnp.transpose(x_nct, (0, 2, 1)).astype(jnp.float32)   # (N, T, C)
    span = (T_out - 1) * stride + 1
    w = w_dw.reshape(C, kernel_size)
    acc = jnp.zeros((N, T_out, C), jnp.float32)
    for k in range(kernel_size):
        s = k * dilation
        acc = acc + x[:, s:s + span:stride, :] * w[:, k][None, None, :]
    acc = acc + b_dw[None, None, :]
    mean = jnp.mean(acc, axis=(0, 1), keepdims=True)
    var = jnp.mean((acc - mean) ** 2, axis=(0, 1), keepdims=True)
    y = (acc - mean) / jnp.sqrt(var + eps) * gamma[None, None, :] + beta[None, None, :]
    out = jnp.einsum('ntc,oc->nto', y, w_pw.reshape(O, C)) + b_pw[None, None, :]
    return jnp.transpose(out, (0, 2, 1))


if __name__ == "__main__":
    # Small shapes consistent with DSDilatedConv1d
    in_channels, out_channels = 4, 8
    kernel_size, dilation, stride = 3, 2, 1
    N, T = 2, 16

    key = jax.random.PRNGKey(0)
    k_x, k_wdw, k_bdw, k_g, k_b, k_wpw, k_bpw = jax.random.split(key, 7)

    x = jax.random.normal(k_x, (N, in_channels, T), dtype=jnp.float32)
    # PyTorch parameter shapes: conv.weight (C,1,K) -> (C,K); conv.bias (C,);
    # bn.weight/bias (C,); pointwise.weight (O,C,1) -> (O,C); pointwise.bias (O,)
    w_dw = 0.3 * jax.random.normal(k_wdw, (in_channels, kernel_size), jnp.float32)
    b_dw = 0.1 * jax.random.normal(k_bdw, (in_channels,), jnp.float32)
    gamma = 1.0 + 0.1 * jax.random.normal(k_g, (in_channels,), jnp.float32)
    beta = 0.1 * jax.random.normal(k_b, (in_channels,), jnp.float32)
    w_pw = 0.3 * jax.random.normal(k_wpw, (out_channels, in_channels), jnp.float32)
    b_pw = 0.1 * jax.random.normal(k_bpw, (out_channels,), jnp.float32)

    out = ds_dilated_conv1d(x, w_dw, b_dw, gamma, beta, w_pw, b_pw,
                            kernel_size=kernel_size, dilation=dilation,
                            stride=stride)
    out = jax.block_until_ready(out)

    ref = _reference(x, w_dw, b_dw, gamma, beta, w_pw, b_pw,
                     kernel_size=kernel_size, dilation=dilation, stride=stride)
    np.testing.assert_allclose(np.asarray(out), np.asarray(ref),
                               rtol=1e-4, atol=1e-5)

    print("KERNEL_OK")
</pallas_src>

<mosaic_0001>
module attributes {stable_mosaic.version = 11 : i64} {
  func.func @_dw_stats_kernel(%arg0: i32, %arg1: i32, %arg2: memref<1x4x16xf32, #tpu.memory_space<vmem>>, %arg3: memref<4x3xf32, #tpu.memory_space<vmem>>, %arg4: memref<4x1xf32, #tpu.memory_space<vmem>>, %arg5: memref<1x4x12xf32, #tpu.memory_space<vmem>>, %arg6: memref<1x1x4x2xf32, #tpu.memory_space<vmem>>) attributes {dimension_semantics = [#tpu.dimension_semantics<parallel>, #tpu.dimension_semantics<parallel>], iteration_bounds = array<i64: 2, 1>, scalar_prefetch = 0 : i64, scratch_operands = 0 : i64, tpu.core_type = #tpu.core_type<tc>, window_params = [{transform_indices = @transform_0, window_bounds = array<i64: 1, 4, 16>}, {pipeline_mode = #tpu.pipeline_mode<synchronous>, transform_indices = @transform_1, window_bounds = array<i64: 4, 3>}, {pipeline_mode = #tpu.pipeline_mode<synchronous>, transform_indices = @transform_2, window_bounds = array<i64: 4, 1>}, {transform_indices = @transform_3, window_bounds = array<i64: 1, 4, 12>}, {transform_indices = @transform_4, window_bounds = array<i64: 1, 1, 4, 2>}]} {
    %c0 = arith.constant 0 : index
    %c0_0 = arith.constant 0 : index
    %0 = vector.load %arg3[%c0, %c0_0] : memref<4x3xf32, #tpu.memory_space<vmem>>, vector<4x3xf32>
    %c0_1 = arith.constant 0 : index
    %c0_2 = arith.constant 0 : index
    %1 = vector.load %arg4[%c0_1, %c0_2] : memref<4x1xf32, #tpu.memory_space<vmem>>, vector<4x1xf32>
    %c0_3 = arith.constant 0 : index
    %c0_4 = arith.constant 0 : index
    %c0_5 = arith.constant 0 : index
    %2 = vector.load %arg2[%c0_3, %c0_4, %c0_5] : memref<1x4x16xf32, #tpu.memory_space<vmem>>, vector<1x4x12xf32>
    %3 = vector.shape_cast %2 : vector<1x4x12xf32> to vector<4x12xf32>
    %4 = vector.extract_strided_slice %0 {offsets = [0, 0], sizes = [4, 1], strides = [1, 1]} : vector<4x3xf32> to vector<4x1xf32>
    %5 = vector.broadcast %4 : vector<4x1xf32> to vector<4x12xf32>
    %6 = arith.mulf %3, %5 : vector<4x12xf32>
    %7 = vector.broadcast %1 : vector<4x1xf32> to vector<4x12xf32>
    %8 = arith.addf %6, %7 : vector<4x12xf32>
    %c0_6 = arith.constant 0 : index
    %c0_7 = arith.constant 0 : index
    %c2 = arith.constant 2 : index
    %9 = vector.load %arg2[%c0_6, %c0_7, %c2] : memref<1x4x16xf32, #tpu.memory_space<vmem>>, vector<1x4x12xf32>
    %10 = vector.shape_cast %9 : vector<1x4x12xf32> to vector<4x12xf32>
    %11 = vector.extract_strided_slice %0 {offsets = [0, 1], sizes = [4, 1], strides = [1, 1]} : vector<4x3xf32> to vector<4x1xf32>
    %12 = vector.broadcast %11 : vector<4x1xf32> to vector<4x12xf32>
    %13 = arith.mulf %10, %12 : vector<4x12xf32>
    %c0_8 = arith.constant 0 : index
    %c0_9 = arith.constant 0 : index
    %c4 = arith.constant 4 : index
    %14 = vector.load %arg2[%c0_8, %c0_9, %c4] : memref<1x4x16xf32, #tpu.memory_space<vmem>>, vector<1x4x12xf32>
    %15 = vector.shape_cast %14 : vector<1x4x12xf32> to vector<4x12xf32>
    %16 = vector.extract_strided_slice %0 {offsets = [0, 2], sizes = [4, 1], strides = [1, 1]} : vector<4x3xf32> to vector<4x1xf32>
    %17 = vector.broadcast %16 : vector<4x1xf32> to vector<4x12xf32>
    %18 = arith.mulf %15, %17 : vector<4x12xf32>
    %19 = arith.addf %8, %18 : vector<4x12xf32>
    %20 = arith.addf %19, %13 : vector<4x12xf32>
    %c0_10 = arith.constant 0 : index
    %c0_11 = arith.constant 0 : index
    %c0_12 = arith.constant 0 : index
    %21 = vector.load %arg5[%c0_10, %c0_11, %c0_12] : memref<1x4x12xf32, #tpu.memory_space<vmem>>, vector<1x4x12xf32>
    %22 = vector.shape_cast %21 : vector<1x4x12xf32> to vector<4x12xf32>
    %23 = vector.shape_cast %20 : vector<4x12xf32> to vector<1x4x12xf32>
    tpu.vector_store %arg5[%c0_10, %c0_11, %c0_12], %23 {strides = array<i32>} : memref<1x4x12xf32, #tpu.memory_space<vmem>>, vector<1x4x12xf32>,
    %cst = arith.constant dense<0.000000e+00> : vector<4xf32>
    %24 = vector.multi_reduction <add>, %20, %cst [1] : vector<4x12xf32> to vector<4xf32>
    %25 = vector.shape_cast %24 : vector<4xf32> to vector<4x1xf32>
    %c0_13 = arith.constant 0 : index
    %c0_14 = arith.constant 0 : index
    %c0_15 = arith.constant 0 : index
    %c0_16 = arith.constant 0 : index
    %26 = vector.load %arg6[%c0_13, %c0_14, %c0_15, %c0_16] : memref<1x1x4x2xf32, #tpu.memory_space<vmem>>, vector<1x1x4x1xf32>
    %27 = vector.shape_cast %26 : vector<1x1x4x1xf32> to vector<4x1xf32>
    %28 = vector.shape_cast %25 : vector<4x1xf32> to vector<1x1x4x1xf32>
    tpu.vector_store %arg6[%c0_13, %c0_14, %c0_15, %c0_16], %28 {strides = array<i32>} : memref<1x1x4x2xf32, #tpu.memory_space<vmem>>, vector<1x1x4x1xf32>,
    %29 = arith.mulf %20, %20 : vector<4x12xf32>
    %cst_17 = arith.constant dense<0.000000e+00> : vector<4xf32>
    %30 = vector.multi_reduction <add>, %29, %cst_17 [1] : vector<4x12xf32> to vector<4xf32>
    %31 = vector.shape_cast %30 : vector<4xf32> to vector<4x1xf32>
    %c0_18 = arith.constant 0 : index
    %c0_19 = arith.constant 0 : index
    %c0_20 = arith.constant 0 : index
    %c1 = arith.constant 1 : index
    %32 = vector.load %arg6[%c0_18, %c0_19, %c0_20, %c1] : memref<1x1x4x2xf32, #tpu.memory_space<vmem>>, vector<1x1x4x1xf32>
    %33 = vector.shape_cast %32 : vector<1x1x4x1xf32> to vector<4x1xf32>
    %34 = vector.shape_cast %31 : vector<4x1xf32> to vector<1x1x4x1xf32>
    tpu.vector_store %arg6[%c0_18, %c0_19, %c0_20, %c1], %34 {strides = array<i32>} : memref<1x1x4x2xf32, #tpu.memory_space<vmem>>, vector<1x1x4x1xf32>,
    return
  }
  func.func @transform_0(%arg0: i32, %arg1: i32) -> (i32, i32, i32) {
    %c0_i32 = arith.constant 0 : i32
    %c0_i32_0 = arith.constant 0 : i32
    %c0_i32_1 = arith.constant 0 : i32
    return %arg0, %c0_i32, %c0_i32_0 : i32, i32, i32
  }
  func.func @transform_1(%arg0: i32, %arg1: i32) -> (i32, i32) {
    %c0_i32 = arith.constant 0 : i32
    %c0_i32_0 = arith.constant 0 : i32
    %c0_i32_1 = arith.constant 0 : i32
    return %c0_i32, %c0_i32_0 : i32, i32
  }
  func.func @transform_2(%arg0: i32, %arg1: i32) -> (i32, i32) {
    %c0_i32 = arith.constant 0 : i32
    %c0_i32_0 = arith.constant 0 : i32
    %c0_i32_1 = arith.constant 0 : i32
    return %c0_i32, %c0_i32_0 : i32, i32
  }
  func.func @transform_3(%arg0: i32, %arg1: i32) -> (i32, i32, i32) {
    %c0_i32 = arith.constant 0 : i32
    %c0_i32_0 = arith.constant 0 : i32
    return %arg0, %c0_i32, %arg1 : i32, i32, i32
  }
  func.func @transform_4(%arg0: i32, %arg1: i32) -> (i32, i32, i32, i32) {
    %c0_i32 = arith.constant 0 : i32
    %c0_i32_0 = arith.constant 0 : i32
    %c0_i32_1 = arith.constant 0 : i32
    return %arg0, %arg1, %c0_i32, %c0_i32_0 : i32, i32, i32, i32
  }
}

</mosaic_0001>

<llo_original>
// kernel: tpu_custom_call.1
$region0: #{tpu_custom_call.1}
  #allocation0 [shape = 'u32[]', space=smem, size = 0x4, offset = 0x4, fixed_abs, tag = 'smem constant byte address 0x4 - core index']
  #allocation1 [shape = 'u32[144,128]{1,0:T(1,128)}', space=vmem, size = 0x12000, scoped, tag = 'internal scratch']
  %s0 = inlined_call_operand.hbm [shape: f32[2,4,16], index: 0, kind: input, shape index: {}]
  %s1 = inlined_call_operand.vmem [shape: f32[4,3], index: 1, kind: input, shape index: {}]
  %s2 = inlined_call_operand.vmem [shape: f32[4,1], index: 2, kind: input, shape index: {}]
  %s3 = inlined_call_operand.hbm [shape: f32[2,4,12], index: 3, kind: output, shape index: {0}]
  %s4 = inlined_call_operand.vmem [shape: f32[2,1,4,2], index: 4, kind: output, shape index: {1}]
  %5 = xla_tuple %s3, %s4
  %s6 = sld [smem:[#allocation0]]
  $region57: #{tpu_custom_call.1} parent=0
    _
  %s8 = ssub.s32 1, %s6
  %s9 = scalar_select 0, %s8, %s6
  $region1: #{tpu_custom_call.1} parent=0
    #allocation2 [shape = 'u8[4096]{0}', space=vmem, size = 0x1000, scoped, tag = 'input window, operand 0']
    #allocation3 [shape = 's32[2]{0}', space=sflag, size = 0x8, scoped, tag = 'scoped memory for tpu_custom_call.1']
    #allocation4 [shape = 's32[2]{0}', space=sflag, size = 0x8, scoped, tag = 'scoped memory for tpu_custom_call.1']
    #allocation5 [shape = 'u8[4096]{0}', space=vmem, size = 0x1000, scoped, tag = 'output window, operand 0']
    %10 = vsyncpa [#allocation3], 0
    %s11 = scalar_lea.sflag [#allocation3], 1
    %12 = vsyncpa %s11, 0
    %13 = vsyncpa [#allocation4], 0
    %s14 = scalar_lea.sflag [#allocation4], 1
    %15 = vsyncpa %s14, 0
    loop: start=0, step=1, limit=4
    $region2: #{tpu_custom_call.1} parent=1 // loop_pre_header
      _
    $region3: #{tpu_custom_call.1} parent=1 // loop_header
      %s17 = sphi 0, %s21
      %p18 = scmp.ge.s32.totalorder %s17, 4
      %s24 = sphi 0, %s36
      %s25 = sphi 0, %s32
      %s26 = sphi 0, %s24
      %s27 = sphi 0, %s25
      %s28 = sphi 0, %s26
      %s29 = sphi 0, %s27
      %s39 = sphi 0, %s41
      %s42 = sphi 0, %s39
      %s43 = sphi 0, %s42
      %s59 = sphi 0, %s43
      %s63 = sphi 0, %s63
      %s65 = sphi 0, %s63
      %s66 = sphi 0, %s65
      %s80 = sphi 0, %s66
      %s84 = sphi 0, %s84
      %s86 = sphi 0, %s84
      %s87 = sphi 0, %s86
      %s101 = sphi 0, %s87
      %s109 = sphi 0, %s111
      %s112 = sphi 0, %s109
      %s113 = sphi 0, %s112
      %s129 = sphi 0, %s113
      %s137 = sphi 0, %s139
      %s140 = sphi 0, %s137
      %s141 = sphi 0, %s140
      %s157 = sphi 0, %s141
    $region4: #{tpu_custom_call.1} parent=1 // loop_header_branch
      %20 = sbr.rel (%p18) target = $region8
    $region5: #{tpu_custom_call.1} parent=1 // loop_body
      %s22 = ssub.s32 %s17, 1
      %s23 = ssub.s32 %s17, 2
      %s30 = sadd.s32 1, %s25
      %p31 = scmp.ge.s32.totalorder %s30, 1
      %s32 = scalar_select %p31, 0, %s30
      %s33 = sadd.s32 1, %s24
      %s34 = scalar_select %p31, %s33, %s24
      %p35 = scmp.ge.s32.totalorder %s34, 2
      %s36 = scalar_select %p35, 0, %s34
      %s37 = ssub.s32 %s24, %s36
      %p38 = scmp.eq.s32.totalorder %s37, 0
      %s40 = sadd.s32 %s39, 1
      %s41 = scalar_select %p38, %s39, %s40
      %p44 = pneg %p38
      %p45 = scmp.eq.s32.totalorder %s17, 1
      %p46 = por %p44, %p45
      %p47 = scmp.ne.s32.totalorder %s39, %s42
      %p48 = scmp.eq.s32.totalorder %s17, 0
      %p49 = por %p47, %p48
      %p50 = scmp.ne.s32.totalorder %s39, %s42
      %p51 = scmp.eq.s32.totalorder %s22, 1
      %p52 = por %p50, %p51
      %p53 = scmp.ne.s32.totalorder %s42, %s43
      %p54 = scmp.eq.s32.totalorder %s22, 0
      %p55 = por %p53, %p54
      %p56 = scmp.ne.s32.totalorder %s42, %s43
      %p57 = scmp.eq.s32.totalorder %s23, 1
      %p58 = por %p56, %p57
      %p60 = scmp.ne.s32.totalorder %s43, %s59
      %p61 = scmp.eq.s32.totalorder %s23, 0
      %p62 = por %p60, %p61
      %s64 = sadd.s32 %s63, 1
      %p67 = scmp.eq.s32.totalorder %s17, 1
      %p68 = scmp.ne.s32.totalorder %s63, %s65
      %p69 = scmp.eq.s32.totalorder %s17, 0
      %p70 = por %p68, %p69
      %p71 = scmp.ne.s32.totalorder %s63, %s65
      %p72 = scmp.eq.s32.totalorder %s22, 1
      %p73 = por %p71, %p72
      %p74 = scmp.ne.s32.totalorder %s65, %s66
      %p75 = scmp.eq.s32.totalorder %s22, 0
      %p76 = por %p74, %p75
      %p77 = scmp.ne.s32.totalorder %s65, %s66
      %p78 = scmp.eq.s32.totalorder %s23, 1
      %p79 = por %p77, %p78
      %p81 = scmp.ne.s32.totalorder %s66, %s80
      %p82 = scmp.eq.s32.totalorder %s23, 0
      %p83 = por %p81, %p82
      %s85 = sadd.s32 %s84, 1
      %p88 = scmp.eq.s32.totalorder %s17, 1
      %p89 = scmp.ne.s32.totalorder %s84, %s86
      %p90 = scmp.eq.s32.totalorder %s17, 0
      %p91 = por %p89, %p90
      %p92 = scmp.ne.s32.totalorder %s84, %s86
      %p93 = scmp.eq.s32.totalorder %s22, 1
      %p94 = por %p92, %p93
      %p95 = scmp.ne.s32.totalorder %s86, %s87
      %p96 = scmp.eq.s32.totalorder %s22, 0
      %p97 = por %p95, %p96
      %p98 = scmp.ne.s32.totalorder %s86, %s87
      %p99 = scmp.eq.s32.totalorder %s23, 1
      %p100 = por %p98, %p99
      %p102 = scmp.ne.s32.totalorder %s87, %s101
      %p103 = scmp.eq.s32.totalorder %s23, 0
      %p104 = por %p102, %p103
      %s105 = ssub.s32 %s24, %s36
      %s106 = ssub.s32 %s25, %s32
      %s107 = sor.u32 %s105, %s106
      %p108 = scmp.eq.s32.totalorder %s107, 0
      %s110 = sadd.s32 %s109, 1
      %s111 = scalar_select %p108, %s109, %s110
      %p114 = pneg %p108
      %p115 = scmp.eq.s32.totalorder %s17, 1
      %p116 = por %p114, %p115
      %p117 = scmp.ne.s32.totalorder %s109, %s112
      %p118 = scmp.eq.s32.totalorder %s17, 0
      %p119 = por %p117, %p118
      %p120 = scmp.ne.s32.totalorder %s109, %s112
      %p121 = scmp.eq.s32.totalorder %s22, 1
      %p122 = por %p120, %p121
      %p123 = scmp.ne.s32.totalorder %s112, %s113
      %p124 = scmp.eq.s32.totalorder %s22, 0
      %p125 = por %p123, %p124
      %p126 = scmp.ne.s32.totalorder %s112, %s113
      %p127 = scmp.eq.s32.totalorder %s23, 1
      %p128 = por %p126, %p127
      %p130 = scmp.ne.s32.totalorder %s113, %s129
      %p131 = scmp.eq.s32.totalorder %s23, 0
      %p132 = por %p130, %p131
      %s133 = ssub.s32 %s24, %s36
      %s134 = ssub.s32 %s25, %s32
      %s135 = sor.u32 %s133, %s134
      %p136 = scmp.eq.s32.totalorder %s135, 0
      %s138 = sadd.s32 %s137, 1
      %s139 = scalar_select %p136, %s137, %s138
      %p142 = pneg %p136
      %p143 = scmp.eq.s32.totalorder %s17, 1
      %p144 = por %p142, %p143
      %p145 = scmp.ne.s32.totalorder %s137, %s140
      %p146 = scmp.eq.s32.totalorder %s17, 0
      %p147 = por %p145, %p146
      %p148 = scmp.ne.s32.totalorder %s137, %s140
      %p149 = scmp.eq.s32.totalorder %s22, 1
      %p150 = por %p148, %p149
      %p151 = scmp.ne.s32.totalorder %s140, %s141
      %p152 = scmp.eq.s32.totalorder %s22, 0
      %p153 = por %p151, %p152
      %p154 = scmp.ne.s32.totalorder %s140, %s141
      %p155 = scmp.eq.s32.totalorder %s23, 1
      %p156 = por %p154, %p155
      %p158 = scmp.ne.s32.totalorder %s141, %s157
      %p159 = scmp.eq.s32.totalorder %s23, 0
      %p160 = por %p158, %p159
      %p161 = scmp.le.s32.totalorder 1, %s17
      %p162 = scmp.lt.s32.totalorder %s17, 3
      %p163 = pnand %p161, %p162
      %p164 = pneg %p163
      // Predicated region
      $region9: #{tpu_custom_call.1} parent=5 // pred_check
        _
      $region10: #{tpu_custom_call.1} parent=5 // pred_check_branch
        %166 = sbr.rel (%p163) target = $region12
      $region11: #{tpu_custom_call.1} parent=5 // pred_region
        %s167 = ssub.s32 %s17, 1
        // Predicated region
        $region13: #{tpu_custom_call.1} parent=11 // pred_check
          %p168 = pneg %p76
        $region14: #{tpu_custom_call.1} parent=11 // pred_check_branch
          %170 = sbr.rel (%p168) target = $region16
        $region15: #{tpu_custom_call.1} parent=11 // pred_region
          _
        $region16: #{tpu_custom_call.1} parent=11 // pred_fallthru
          _
        // Predicated region
        $region17: #{tpu_custom_call.1} parent=11 // pred_check
          %p171 = pneg %p97
        $region18: #{tpu_custom_call.1} parent=11 // pred_check_branch
          %173 = sbr.rel (%p171) target = $region20
        $region19: #{tpu_custom_call.1} parent=11 // pred_region
          _
        $region20: #{tpu_custom_call.1} parent=11 // pred_fallthru
          _
      $region12: #{tpu_custom_call.1} parent=5 // pred_fallthru
        _
      %p174 = scmp.lt.s32.totalorder %s17, 2
      // Predicated region
      $region21: #{tpu_custom_call.1} parent=5 // pred_check
        %p175 = pneg %p174
      $region22: #{tpu_custom_call.1} parent=5 // pred_check_branch
        %177 = sbr.rel (%p175) target = $region24
      $region23: #{tpu_custom_call.1} parent=5 // pred_region
        // Predicated region
        $region25: #{tpu_custom_call.1} parent=23 // pred_check
          %p178 = pneg %p49
        $region26: #{tpu_custom_call.1} parent=23 // pred_check_branch
          %180 = sbr.rel (%p178) target = $region28
        $region27: #{tpu_custom_call.1} parent=23 // pred_region
          %s181 = sand.u32 %s39, 1
          %s182 = scalar_lea.sflag [#allocation3], %s181
          %s183 = sand.u32 %s39, 1
          %s184 = smul.addr %s183, 4
          %s185 = scalar_lea.vmem [#allocation2], %s184
          %s187 = ssub.s32 64, 64
          %188 = vsyncadd %s182, %s187
          %s189 = smul.addr %s24, 64
          %s190 = scalar_lea.hbm %s0, %s189
          %s192 = sshll.u32 %s185, 4
          %s193 = int_to_ptr.vmem [resolvable:$true] %s192
          %195 = dma.hbm_to_vmem [thread:$0]  %s190, 64, %s193, %s182
        $region28: #{tpu_custom_call.1} parent=23 // pred_fallthru
          _
      $region24: #{tpu_custom_call.1} parent=5 // pred_fallthru
        _
      %p196 = scmp.le.s32.totalorder 1, %s17
      %p197 = scmp.lt.s32.totalorder %s17, 3
      %p198 = pnand %p196, %p197
      %p199 = pneg %p198
      // Predicated region
      $region29: #{tpu_custom_call.1} parent=5 // pred_check
        _
      $region30: #{tpu_custom_call.1} parent=5 // pred_check_branch
        %201 = sbr.rel (%p198) target = $region32
      $region31: #{tpu_custom_call.1} parent=5 // pred_region
        %s202 = ssub.s32 %s17, 1
        %s203 = sand.u32 %s42, 1
        %s204 = scalar_lea.sflag [#allocation3], %s203
        %s205 = sand.u32 %s42, 1
        %s206 = smul.addr %s205, 4
        %s207 = scalar_lea.vmem [#allocation2], %s206
        // Predicated region
        $region33: #{tpu_custom_call.1} parent=31 // pred_check
          %p208 = pneg %p55
        $region34: #{tpu_custom_call.1} parent=31 // pred_check_branch
          %210 = sbr.rel (%p208) target = $region36
        $region35: #{tpu_custom_call.1} parent=31 // pred_region
          %211 = dma.done %s204, 64
        $region36: #{tpu_custom_call.1} parent=31 // pred_fallthru
          _
        %s212 = sand.u32 %s42, 1
        %s213 = scalar_lea.sflag [#allocation3], %s212
        %s214 = sand.u32 %s42, 1
        %s215 = smul.addr %s214, 4
        %s216 = scalar_lea.vmem [#allocation2], %s215
        %p217 = pneg %p55
        %p218 = pneg %p52
        %p219 = pneg %p76
        %p220 = pneg %p73
        %p221 = pneg %p97
        %p222 = pneg %p94
        %p223 = pneg %p125
        %p224 = pneg %p122
        %s225 = sand.u32 %s112, 1
        %s226 = scalar_lea.sflag [#allocation4], %s225
        %s227 = sand.u32 %s112, 1
        %s228 = smul.addr %s227, 4
        %s229 = scalar_lea.vmem [#allocation5], %s228
        %p230 = pneg %p153
        %p231 = pneg %p150
        %p232 = scmp.lt.s32.totalorder %s26, 1
        %s233 = scalar_select %p232, %s26, 1
        %p234 = scmp.lt.s32.totalorder %s27, 0
        %s235 = scalar_select %p234, %s27, 0
        %s236 = sadd.s32 %s235, %s233
        %s237 = smul.addr %s236, 4
        %s238 = scalar_lea.vmem %s4, %s237
        %p239 = scmp.lt.s32.totalorder %s26, 1
        %s240 = scalar_select %p239, %s26, 1
        %p241 = scmp.lt.s32.totalorder %s27, 0
        %s242 = scalar_select %p241, %s27, 0
        %s243 = sadd.s32 %s242, %s240
        %s244 = smul.addr %s243, 4
        %s245 = scalar_lea.vmem %s4, %s244
        %v246 = vld [vmem:[%s1] sm:$0xf]
        %v247 = vld [vmem:[%s2] sm:$0xf]
        %v248 = vld [vmem:[%s207] sm:$0xf]
        %250 = vset.pattern.permute.xlu0 0
        %251 = vperm.xlu0 %250, %v246
        %v252 = vpop.permute.xlu0 %251
        %v254 = vmul.f32 %v248, %v252
        %256 = vset.pattern.permute.xlu0 0
        %257 = vperm.xlu0 %256, %v247
        %v258 = vpop.permute.xlu0 %257
        %v260 = vadd.f32 %v254, %v258
        %261 = vset.pattern.permute.xlu0 1
        %262 = vperm.xlu0 %261, %v246
        %v263 = vpop.permute.xlu0 %262
        %v265 = vmul.f32 %v248, %v263
        %266 = vset.pattern.permute.xlu0 2
        %267 = vperm.xlu0 %266, %v246
        %v268 = vpop.permute.xlu0 %267
        %v270 = vmul.f32 %v248, %v268
        %272 = vrot.lane.b32.xlu0 %v270, 124
        %v273 = vpop.permute.xlu0 %272
        %v275 = vadd.f32 %v260, %v273
        %277 = vrot.lane.b32.xlu0 %v265, 126
        %v278 = vpop.permute.xlu0 %277
        %v280 = vadd.f32 %v275, %v278
        %vm281 = vcmask 93184
        %282 = vst.msk [vmem:[%s229] sm:$0xf] %vm281, %v280
        %v283 = vsel %vm281, %v280, 0.0
        %284 = vadd.xlane.f32.xlu0 %v283
        %v285 = vpop.xlane.xlu0 %284
        %vm286 = vcmask 3072
        %287 = vst.msk [vmem:[%s245] sm:$0xf] %vm286, %v285
        %v288 = vmul.f32 %v280, %v280
        %v289 = vsel %vm281, %v288, 0.0
        %290 = vadd.xlane.f32.xlu0 %v289
        %v291 = vpop.xlane.xlu0 %290
        %vm292 = vcmask 11272
        %293 = vst.msk [vmem:[%s245] sm:$0xf] %vm292, %v291
        %s294 = sand.u32 %s112, 1
        %s295 = scalar_lea.sflag [#allocation4], %s294
        %s296 = sand.u32 %s112, 1
        %s297 = smul.addr %s296, 4
        %s298 = scalar_lea.vmem [#allocation5], %s297
        %p299 = scmp.lt.s32.totalorder %s26, 1
        %s300 = scalar_select %p299, %s26, 1
        %p301 = scmp.lt.s32.totalorder %s27, 0
        %s302 = scalar_select %p301, %s27, 0
        %s303 = sadd.s32 %s302, %s300
        %s304 = smul.addr %s303, 4
        %s305 = scalar_lea.vmem %s4, %s304
        // Predicated region
        $region37: #{tpu_custom_call.1} parent=31 // pred_check
          %p306 = pneg %p122
        $region38: #{tpu_custom_call.1} parent=31 // pred_check_branch
          %308 = sbr.rel (%p306) target = $region40
        $region39: #{tpu_custom_call.1} parent=31 // pred_region
          %s310 = ssub.s32 64, 64
          %311 = vsyncadd %s295, %s310
          %s312 = sadd.s32 %s27, %s26
          %s313 = smul.addr %s312, 64
          %s314 = scalar_lea.hbm %s3, %s313
          %s316 = sshll.u32 %s298, 4
          %s317 = int_to_ptr.vmem [resolvable:$true] %s316
          %319 = dma.vmem_to_hbm [thread:$0]  %s317, 64, %s314, %s295
        $region40: #{tpu_custom_call.1} parent=31 // pred_fallthru
          _
        // Predicated region
        $region41: #{tpu_custom_call.1} parent=31 // pred_check
          %p320 = pneg %p150
        $region42: #{tpu_custom_call.1} parent=31 // pred_check_branch
          %322 = sbr.rel (%p320) target = $region44
        $region43: #{tpu_custom_call.1} parent=31 // pred_region
          _
        $region44: #{tpu_custom_call.1} parent=31 // pred_fallthru
          _
      $region32: #{tpu_custom_call.1} parent=5 // pred_fallthru
        _
      %p323 = scmp.le.s32.totalorder 2, %s17
      // Predicated region
      $region45: #{tpu_custom_call.1} parent=5 // pred_check
        %p324 = pneg %p323
      $region46: #{tpu_custom_call.1} parent=5 // pred_check_branch
        %326 = sbr.rel (%p324) target = $region48
      $region47: #{tpu_custom_call.1} parent=5 // pred_region
        %s327 = ssub.s32 %s17, 2
        // Predicated region
        $region49: #{tpu_custom_call.1} parent=47 // pred_check
          %p328 = pneg %p128
        $region50: #{tpu_custom_call.1} parent=47 // pred_check_branch
          %330 = sbr.rel (%p328) target = $region52
        $region51: #{tpu_custom_call.1} parent=47 // pred_region
          %s331 = sand.u32 %s113, 1
          %s332 = scalar_lea.sflag [#allocation4], %s331
          %s333 = sand.u32 %s113, 1
          %s334 = smul.addr %s333, 4
          %s335 = scalar_lea.vmem [#allocation5], %s334
          %336 = dma.done %s332, 64
        $region52: #{tpu_custom_call.1} parent=47 // pred_fallthru
          _
        // Predicated region
        $region53: #{tpu_custom_call.1} parent=47 // pred_check
          %p337 = pneg %p156
        $region54: #{tpu_custom_call.1} parent=47 // pred_check_branch
          %339 = sbr.rel (%p337) target = $region56
        $region55: #{tpu_custom_call.1} parent=47 // pred_region
          %p340 = scmp.lt.s32.totalorder %s28, 1
          %s341 = scalar_select %p340, %s28, 1
          %p342 = scmp.lt.s32.totalorder %s29, 0
          %s343 = scalar_select %p342, %s29, 0
          %s344 = sadd.s32 %s343, %s341
          %s345 = smul.addr %s344, 4
          %s346 = scalar_lea.vmem %s4, %s345
        $region56: #{tpu_custom_call.1} parent=47 // pred_fallthru
          _
      $region48: #{tpu_custom_call.1} parent=5 // pred_fallthru
        _
    $region6: #{tpu_custom_call.1} parent=1 // loop_footer
      %s21 = sadd.s32 1, %s17
    $region7: #{tpu_custom_call.1} parent=1 // loop_footer_branch
      %16 = sbr.rel target = $region3
    $region8: #{tpu_custom_call.1} parent=1 // loop_exit
      _
    %347 = vsyncpa [#allocation3], 1
    %s348 = scalar_lea.sflag [#allocation3], 1
    %349 = vsyncpa %s348, 1
    %350 = vsyncpa [#allocation4], 1
    %s351 = scalar_lea.sflag [#allocation4], 1
    %352 = vsyncpa %s351, 1

</llo_original>
